<compile_context>
chip_gen: v6e
topology: v6e:2x2x1
jax: 0.10.0
libtpu: 0.0.40
codegen_flags: <defaults>
</compile_context>

<pallas_src>
import functools

import jax
import jax.numpy as jnp
from jax.experimental import pallas as pl
from jax.experimental.pallas import tpu as pltpu


def _round_up(x, m):
    return ((x + m - 1) // m) * m


# ---------------------------------------------------------------------------
# Kernel: one output tile = x_tile @ Wi_tile + orig_tile @ Ws_tile + bias_tile
# ---------------------------------------------------------------------------
def icn_layer_kernel(x_ref, orig_ref, w_int_ref, w_sc_ref, b_ref, out_ref):
    acc = jnp.dot(x_ref[...], w_int_ref[...],
                  preferred_element_type=jnp.float32)
    acc = acc + jnp.dot(orig_ref[...], w_sc_ref[...],
                        preferred_element_type=jnp.float32)
    out_ref[...] = (acc + b_ref[...]).astype(out_ref.dtype)


# ---------------------------------------------------------------------------
# One-time parameter prep (hoisted out of the per-call forward; cache result).
# ---------------------------------------------------------------------------
def prepare_icn_params(w_internal, b_internal, w_shortcut, b_shortcut,
                       *, compute_dtype=None):
    """Pad the output/lane dim to a multiple of 128 and pre-sum the biases.

    Weights come in pre-transposed as [in_features, post_size]; biases as
    [post_size].  Returns (w_int_padded, w_sc_padded, bias_f32_padded)."""
    post_size = w_internal.shape[1]
    n_pad = _round_up(post_size, 128)
    pad_n = n_pad - post_size

    w_i = jnp.pad(w_internal, ((0, 0), (0, pad_n))) if pad_n else w_internal
    w_s = jnp.pad(w_shortcut, ((0, 0), (0, pad_n))) if pad_n else w_shortcut
    bias = (b_internal.reshape(-1).astype(jnp.float32)
            + b_shortcut.reshape(-1).astype(jnp.float32))
    if pad_n:
        bias = jnp.pad(bias, (0, pad_n))
    bias = bias.reshape(1, n_pad)

    if compute_dtype is not None:
        w_i = w_i.astype(compute_dtype)
        w_s = w_s.astype(compute_dtype)
    return w_i, w_s, bias


# ---------------------------------------------------------------------------
# Tile selection helpers
# ---------------------------------------------------------------------------
_VMEM_LIMIT_BYTES = 48 * 1024 * 1024     # explicit scoped-VMEM limit (all gens)
_VMEM_BUDGET_BYTES = 36 * 1024 * 1024    # our double-buffered blocks stay below


def _vmem_estimate(tm, tn, k1, k2, in_bytes, out_bytes):
    act = 2 * tm * (k1 + k2) * in_bytes       # double-buffered x + original
    wgt = 2 * (k1 + k2) * tn * in_bytes       # double-buffered weights
    bias = 2 * tn * 4
    out = 2 * tm * tn * out_bytes
    return act + wgt + bias + out


def _choose_batch_tile(batch, align, max_tile=512, max_pad_frac=0.125):
    """Largest batch tile whose zero-padding waste stays below max_pad_frac."""
    b_aligned = _round_up(batch, align)
    if b_aligned <= max_tile:
        return b_aligned
    t = max_tile
    while t > align:
        if _round_up(batch, t) - batch <= max_pad_frac * batch:
            return t
        t //= 2
    return align


def _choose_n_tile(n_pad, max_tile=512):
    """Largest multiple of 128 that is <= max_tile and divides n_pad."""
    t = min(max_tile, n_pad)
    t = (t // 128) * 128
    t = max(t, 128)
    while t > 128 and n_pad % t:
        t -= 128
    return t


# ---------------------------------------------------------------------------
# Forward
# ---------------------------------------------------------------------------
def icn_layer_forward(x, original, w_int, w_sc, bias, *, post_size,
                      compute_dtype=None):
    """Pallas forward matching ICN_layer.forward(x, original) -> (out, original).

    x:        [B, pre_size]
    original: [B, input_size]
    w_int:    [pre_size,   n_pad]   (from prepare_icn_params)
    w_sc:     [input_size, n_pad]
    bias:     [1, n_pad]  f32 (b_internal + b_shortcut, zero-padded)
    """
    B, pre_size = x.shape
    _, input_size = original.shape
    n_pad = w_int.shape[1]
    out_dtype = x.dtype

    x_k = x.astype(compute_dtype) if compute_dtype is not None else x
    o_k = original.astype(compute_dtype) if compute_dtype is not None else original
    in_bytes = jnp.dtype(x_k.dtype).itemsize
    out_bytes = jnp.dtype(out_dtype).itemsize

    # ---- Tile selection ---------------------------------------------------
    align = 16 if in_bytes < 4 else 8            # bf16 sublane packing needs 16
    tm = _choose_batch_tile(B, align)
    tn = _choose_n_tile(n_pad)

    # Shrink until the double-buffered footprint fits the VMEM budget.
    while (_vmem_estimate(tm, tn, pre_size, input_size, in_bytes, out_bytes)
           > _VMEM_BUDGET_BYTES) and tn > 128:
        tn = _choose_n_tile(n_pad, max_tile=tn - 128)
    while (_vmem_estimate(tm, tn, pre_size, input_size, in_bytes, out_bytes)
           > _VMEM_BUDGET_BYTES) and tm > align:
        tm = max(align, _round_up(tm // 2, align))
    # TODO(synk): for very large contraction dims (pre_size + input_size in the
    # tens of thousands) add a K grid axis with an f32 VMEM accumulator
    # (pl.when init/finalize) instead of shrinking tm/tn further.

    b_pad = _round_up(B, tm)
    grid_b = b_pad // tm
    grid_n = n_pad // tn

    # v7x megacore: make sure there are >= 2 grid cells when shapes allow.
    if grid_b == 1 and grid_n == 1:
        if n_pad >= 256:
            tn = 128
            grid_n = n_pad // tn
        elif b_pad % (2 * align) == 0:
            tm = b_pad // 2
            grid_b = 2

    # ---- Pad activations on the batch axis only ----------------------------
    if b_pad != B:
        x_k = jnp.pad(x_k, ((0, b_pad - B), (0, 0)))
        o_k = jnp.pad(o_k, ((0, b_pad - B), (0, 0)))

    # ---- Grid orientation: keep the larger operand VMEM-resident -----------
    act_bytes = B * (pre_size + input_size) * in_bytes      # one activation pass
    w_bytes = (pre_size + input_size) * n_pad * in_bytes    # one weight pass
    weights_resident = (grid_n - 1) * act_bytes <= (grid_b - 1) * w_bytes

    if weights_resident:
        # Out-features outer, batch innermost: weight/bias block index is
        # constant across the inner loop -> DMA'd once per column tile.
        grid = (grid_n, grid_b)
        act_map = lambda j, i: (i, 0)
        w_map = lambda j, i: (0, j)
        out_map = lambda j, i: (i, j)
    else:
        # Activation-heavy shapes: keep activations resident instead.
        grid = (grid_b, grid_n)
        act_map = lambda i, j: (i, 0)
        w_map = lambda i, j: (0, j)
        out_map = lambda i, j: (i, j)

    cost = pl.CostEstimate(
        flops=2 * b_pad * (pre_size + input_size) * n_pad,
        transcendentals=0,
        bytes_accessed=(x_k.size * in_bytes + o_k.size * in_bytes
                        + w_int.size * jnp.dtype(w_int.dtype).itemsize
                        + w_sc.size * jnp.dtype(w_sc.dtype).itemsize
                        + bias.size * 4 + b_pad * n_pad * out_bytes))

    out = pl.pallas_call(
        icn_layer_kernel,
        out_shape=jax.ShapeDtypeStruct((b_pad, n_pad), out_dtype),
        grid=grid,
        in_specs=[
            pl.BlockSpec((tm, pre_size), act_map),      # x         (streamed)
            pl.BlockSpec((tm, input_size), act_map),    # original  (streamed)
            pl.BlockSpec((pre_size, tn), w_map),        # W_internal (resident)
            pl.BlockSpec((input_size, tn), w_map),      # W_shortcut (resident)
            pl.BlockSpec((1, tn), w_map),               # fused f32 bias
        ],
        out_specs=pl.BlockSpec((tm, tn), out_map),
        compiler_params=pltpu.CompilerParams(
            dimension_semantics=("parallel", "parallel"),
            vmem_limit_bytes=_VMEM_LIMIT_BYTES),
        cost_estimate=cost,
    )(x_k, o_k, w_int, w_sc, bias)

    # Slice padding away; `original` passes straight through unchanged.
    return out[:B, :post_size], original


# ---------------------------------------------------------------------------
# Demo / correctness check
# ---------------------------------------------------------------------------
def init_linear_params(key, in_features, out_features, dtype=jnp.float32):
    """nn.Linear-style U(-1/sqrt(fan_in), 1/sqrt(fan_in)) init.
    Weight returned already transposed to [in_features, out_features]."""
    kw, kb = jax.random.split(key)
    bound = 1.0 / (in_features ** 0.5)
    w = jax.random.uniform(kw, (in_features, out_features), dtype,
                           minval=-bound, maxval=bound)
    b = jax.random.uniform(kb, (out_features,), dtype,
                           minval=-bound, maxval=bound)
    return w, b


if __name__ == "__main__":
    # Small shapes consistent with the module's two Linear layers.
    batch = 8
    input_size = 16   # size of `original`
    pre_size = 32     # size of `x`
    post_size = 24    # output size

    key = jax.random.PRNGKey(0)
    kx, korig, kint, ksc = jax.random.split(key, 4)

    x = jax.random.normal(kx, (batch, pre_size), jnp.float32)
    original = jax.random.normal(korig, (batch, input_size), jnp.float32)

    w_int, b_int = init_linear_params(kint, pre_size, post_size)
    w_sc, b_sc = init_linear_params(ksc, input_size, post_size)

    # One-time prep (output-dim padding + bias fusion) -- cached across calls.
    w_int_p, w_sc_p, bias_p = prepare_icn_params(w_int, b_int, w_sc, b_sc)

    fwd = jax.jit(functools.partial(icn_layer_forward, post_size=post_size,
                                    compute_dtype=None))
    out, orig_out = fwd(x, original, w_int_p, w_sc_p, bias_p)
    jax.block_until_ready((out, orig_out))

    # Reference in plain JAX (same math as the PyTorch module).
    ref = x @ w_int + b_int + original @ w_sc + b_sc
    assert out.shape == (batch, post_size)
    assert jnp.allclose(out, ref, atol=1e-5, rtol=1e-5)
    assert jnp.array_equal(orig_out, original)

    print("KERNEL_OK")
</pallas_src>

<mosaic_0001>
module attributes {stable_mosaic.version = 11 : i64} {
  func.func @icn_layer_kernel(%arg0: i32, %arg1: i32, %arg2: memref<8x32xf32, #tpu.memory_space<vmem>>, %arg3: memref<8x16xf32, #tpu.memory_space<vmem>>, %arg4: memref<32x128xf32, #tpu.memory_space<vmem>>, %arg5: memref<16x128xf32, #tpu.memory_space<vmem>>, %arg6: memref<1x128xf32, #tpu.memory_space<vmem>>, %arg7: memref<8x128xf32, #tpu.memory_space<vmem>>) attributes {dimension_semantics = [#tpu.dimension_semantics<parallel>, #tpu.dimension_semantics<parallel>], iteration_bounds = array<i64: 1, 1>, scalar_prefetch = 0 : i64, scratch_operands = 0 : i64, tpu.core_type = #tpu.core_type<tc>, window_params = [{transform_indices = @transform_0, window_bounds = array<i64: 8, 32>}, {transform_indices = @transform_1, window_bounds = array<i64: 8, 16>}, {transform_indices = @transform_2, window_bounds = array<i64: 32, 128>}, {transform_indices = @transform_3, window_bounds = array<i64: 16, 128>}, {transform_indices = @transform_4, window_bounds = array<i64: 1, 128>}, {transform_indices = @transform_5, window_bounds = array<i64: 8, 128>}]} {
    %c0 = arith.constant 0 : index
    %c0_0 = arith.constant 0 : index
    %0 = vector.load %arg2[%c0, %c0_0] : memref<8x32xf32, #tpu.memory_space<vmem>>, vector<8x32xf32>
    %c0_1 = arith.constant 0 : index
    %c0_2 = arith.constant 0 : index
    %1 = vector.load %arg4[%c0_1, %c0_2] : memref<32x128xf32, #tpu.memory_space<vmem>>, vector<32x128xf32>
    %cst = arith.constant dense<0.000000e+00> : vector<8x128xf32>
    %2 = tpu.matmul %0, %1, %cst {dimension_numbers = #tpu.dot_dimension_numbers<[1], [0], [0], [1], [0, 0, 1, 1], [], []>} : vector<8x32xf32>, vector<32x128xf32>, vector<8x128xf32> -> vector<8x128xf32>
    %c0_3 = arith.constant 0 : index
    %c0_4 = arith.constant 0 : index
    %3 = vector.load %arg3[%c0_3, %c0_4] : memref<8x16xf32, #tpu.memory_space<vmem>>, vector<8x16xf32>
    %c0_5 = arith.constant 0 : index
    %c0_6 = arith.constant 0 : index
    %4 = vector.load %arg5[%c0_5, %c0_6] : memref<16x128xf32, #tpu.memory_space<vmem>>, vector<16x128xf32>
    %cst_7 = arith.constant dense<0.000000e+00> : vector<8x128xf32>
    %5 = tpu.matmul %3, %4, %cst_7 {dimension_numbers = #tpu.dot_dimension_numbers<[1], [0], [0], [1], [0, 0, 1, 1], [], []>} : vector<8x16xf32>, vector<16x128xf32>, vector<8x128xf32> -> vector<8x128xf32>
    %6 = arith.addf %2, %5 : vector<8x128xf32>
    %c0_8 = arith.constant 0 : index
    %c0_9 = arith.constant 0 : index
    %7 = vector.load %arg6[%c0_8, %c0_9] : memref<1x128xf32, #tpu.memory_space<vmem>>, vector<1x128xf32>
    %8 = vector.broadcast %7 : vector<1x128xf32> to vector<8x128xf32>
    %9 = arith.addf %6, %8 : vector<8x128xf32>
    %c0_10 = arith.constant 0 : index
    %c0_11 = arith.constant 0 : index
    %10 = vector.load %arg7[%c0_10, %c0_11] : memref<8x128xf32, #tpu.memory_space<vmem>>, vector<8x128xf32>
    tpu.vector_store %arg7[%c0_10, %c0_11], %9 {strides = array<i32>} : memref<8x128xf32, #tpu.memory_space<vmem>>, vector<8x128xf32>,
    return
  }
  func.func @transform_0(%arg0: i32, %arg1: i32) -> (i32, i32) {
    %c0_i32 = arith.constant 0 : i32
    %c0_i32_0 = arith.constant 0 : i32
    return %arg1, %c0_i32 : i32, i32
  }
  func.func @transform_1(%arg0: i32, %arg1: i32) -> (i32, i32) {
    %c0_i32 = arith.constant 0 : i32
    %c0_i32_0 = arith.constant 0 : i32
    return %arg1, %c0_i32 : i32, i32
  }
  func.func @transform_2(%arg0: i32, %arg1: i32) -> (i32, i32) {
    %c0_i32 = arith.constant 0 : i32
    %c0_i32_0 = arith.constant 0 : i32
    return %c0_i32, %arg0 : i32, i32
  }
  func.func @transform_3(%arg0: i32, %arg1: i32) -> (i32, i32) {
    %c0_i32 = arith.constant 0 : i32
    %c0_i32_0 = arith.constant 0 : i32
    return %c0_i32, %arg0 : i32, i32
  }
  func.func @transform_4(%arg0: i32, %arg1: i32) -> (i32, i32) {
    %c0_i32 = arith.constant 0 : i32
    %c0_i32_0 = arith.constant 0 : i32
    return %c0_i32, %arg0 : i32, i32
  }
  func.func @transform_5(%arg0: i32, %arg1: i32) -> (i32, i32) {
    %c0_i32 = arith.constant 0 : i32
    return %arg1, %arg0 : i32, i32
  }
}

</mosaic_0001>

<llo_original>
// kernel: icn_layer_forward.1
$region0: #{icn_layer_forward.1}
  #allocation0 [shape = 'u32[]', space=smem, size = 0x4, offset = 0x4, fixed_abs, tag = 'smem constant byte address 0x4 - core index']
  #allocation1 [shape = 'u32[144,128]{1,0:T(1,128)}', space=vmem, size = 0x12000, scoped, tag = 'internal scratch']
  %s0 = inlined_call_operand.hbm [shape: f32[8,32], index: 0, kind: input, shape index: {}]
  %s1 = inlined_call_operand.hbm [shape: f32[8,16], index: 1, kind: input, shape index: {}]
  %s2 = inlined_call_operand.hbm [shape: f32[32,128], index: 2, kind: input, shape index: {}]
  %s3 = inlined_call_operand.hbm [shape: f32[16,128], index: 3, kind: input, shape index: {}]
  %s4 = inlined_call_operand.vmem [shape: f32[1,128], index: 4, kind: input, shape index: {}]
  %s5 = inlined_call_operand.hbm [shape: f32[8,128], index: 5, kind: output, shape index: {}]
  %s6 = sld [smem:[#allocation0]]
  $region46: #{icn_layer_forward.1} parent=0
    _
  %s8 = ssub.s32 1, %s6
  %s9 = scalar_select 0, %s8, %s6
  $region1: #{icn_layer_forward.1} parent=0
    #allocation2 [shape = 'u8[4096]{0}', space=vmem, size = 0x1000, scoped, tag = 'input window, operand 0, single buffered']
    #allocation3 [shape = 's32[1]{0}', space=sflag, size = 0x4, scoped, tag = 'scoped memory for icn_layer_forward.1']
    #allocation4 [shape = 's32[1]{0}', space=sflag, size = 0x4, scoped, tag = 'scoped memory for icn_layer_forward.1']
    #allocation5 [shape = 'u8[4096]{0}', space=vmem, size = 0x1000, scoped, tag = 'input window, operand 1, single buffered']
    #allocation6 [shape = 's32[1]{0}', space=sflag, size = 0x4, scoped, tag = 'scoped memory for icn_layer_forward.1']
    #allocation7 [shape = 'u8[16384]{0}', space=vmem, size = 0x4000, scoped, tag = 'input window, operand 2, single buffered']
    #allocation8 [shape = 'u8[8192]{0}', space=vmem, size = 0x2000, scoped, tag = 'input window, operand 3, single buffered']
    #allocation9 [shape = 's32[1]{0}', space=sflag, size = 0x4, scoped, tag = 'scoped memory for icn_layer_forward.1']
    #allocation10 [shape = 'u8[4096]{0}', space=vmem, size = 0x1000, scoped, tag = 'output window, operand 0, single buffered']
    %10 = vsyncpa [#allocation3], 0
    %11 = vsyncpa [#allocation6], 0
    %12 = vsyncpa [#allocation9], 0
    %13 = vsyncpa [#allocation4], 0
    // Predicated region
    $region2: #{icn_layer_forward.1} parent=1 // pred_check
      _
    $region3: #{icn_layer_forward.1} parent=1 // pred_check_branch
      %15 = sbr.rel (0) target = $region5
    $region4: #{icn_layer_forward.1} parent=1 // pred_region
      %s17 = ssub.s32 128, 128
      %18 = vsyncadd [#allocation3], %s17
      %s20 = sshll.u32 [#allocation2], 4
      %s21 = int_to_ptr.vmem [resolvable:$true] %s20
      %23 = dma.hbm_to_vmem [thread:$0]  %s0, 128, %s21, [#allocation3]
    $region5: #{icn_layer_forward.1} parent=1 // pred_fallthru
      _
    // Predicated region
    $region6: #{icn_layer_forward.1} parent=1 // pred_check
      _
    $region7: #{icn_layer_forward.1} parent=1 // pred_check_branch
      %25 = sbr.rel (0) target = $region9
    $region8: #{icn_layer_forward.1} parent=1 // pred_region
      %s27 = ssub.s32 128, 128
      %28 = vsyncadd [#allocation6], %s27
      %s30 = sshll.u32 [#allocation5], 4
      %s31 = int_to_ptr.vmem [resolvable:$true] %s30
      %33 = dma.hbm_to_vmem [thread:$0]  %s1, 128, %s31, [#allocation6]
    $region9: #{icn_layer_forward.1} parent=1 // pred_fallthru
      _
    // Predicated region
    $region10: #{icn_layer_forward.1} parent=1 // pred_check
      _
    $region11: #{icn_layer_forward.1} parent=1 // pred_check_branch
      %35 = sbr.rel (0) target = $region13
    $region12: #{icn_layer_forward.1} parent=1 // pred_region
      %s37 = ssub.s32 512, 512
      %38 = vsyncadd [#allocation6], %s37
      %s39 = sshll.u32 [#allocation7], 4
      %s40 = int_to_ptr.vmem [resolvable:$true] %s39
      %45 = dma.hbm_to_vmem [thread:$0]  %s2, 512, %s40, [#allocation6], 128, 128, 8
    $region13: #{icn_layer_forward.1} parent=1 // pred_fallthru
      _
    // Predicated region
    $region14: #{icn_layer_forward.1} parent=1 // pred_check
      _
    $region15: #{icn_layer_forward.1} parent=1 // pred_check_branch
      %47 = sbr.rel (0) target = $region17
    $region16: #{icn_layer_forward.1} parent=1 // pred_region
      %s49 = ssub.s32 256, 256
      %50 = vsyncadd [#allocation9], %s49
      %s51 = sshll.u32 [#allocation8], 4
      %s52 = int_to_ptr.vmem [resolvable:$true] %s51
      %57 = dma.hbm_to_vmem [thread:$0]  %s3, 256, %s52, [#allocation9], 128, 128, 8
    $region17: #{icn_layer_forward.1} parent=1 // pred_fallthru
      _
    // Predicated region
    $region18: #{icn_layer_forward.1} parent=1 // pred_check
      _
    $region19: #{icn_layer_forward.1} parent=1 // pred_check_branch
      %59 = sbr.rel (0) target = $region21
    $region20: #{icn_layer_forward.1} parent=1 // pred_region
      _
    $region21: #{icn_layer_forward.1} parent=1 // pred_fallthru
      _
    // Predicated region
    $region22: #{icn_layer_forward.1} parent=1 // pred_check
      _
    $region23: #{icn_layer_forward.1} parent=1 // pred_check_branch
      %61 = sbr.rel (0) target = $region25
    $region24: #{icn_layer_forward.1} parent=1 // pred_region
      %62 = dma.done [#allocation3], 128
    $region25: #{icn_layer_forward.1} parent=1 // pred_fallthru
      _
    // Predicated region
    $region26: #{icn_layer_forward.1} parent=1 // pred_check
      _
    $region27: #{icn_layer_forward.1} parent=1 // pred_check_branch
      %64 = sbr.rel (0) target = $region29
    $region28: #{icn_layer_forward.1} parent=1 // pred_region
      %65 = dma.done [#allocation6], 128
    $region29: #{icn_layer_forward.1} parent=1 // pred_fallthru
      _
    // Predicated region
    $region30: #{icn_layer_forward.1} parent=1 // pred_check
      _
    $region31: #{icn_layer_forward.1} parent=1 // pred_check_branch
      %67 = sbr.rel (0) target = $region33
    $region32: #{icn_layer_forward.1} parent=1 // pred_region
      %68 = dma.done [#allocation6], 512
    $region33: #{icn_layer_forward.1} parent=1 // pred_fallthru
      _
    // Predicated region
    $region34: #{icn_layer_forward.1} parent=1 // pred_check
      _
    $region35: #{icn_layer_forward.1} parent=1 // pred_check_branch
      %70 = sbr.rel (0) target = $region37
    $region36: #{icn_layer_forward.1} parent=1 // pred_region
      %71 = dma.done [#allocation9], 256
    $region37: #{icn_layer_forward.1} parent=1 // pred_fallthru
      _
    %v72 = vld [vmem:[#allocation2] sm:$0xff]
    %v73 = vld [vmem:[#allocation7] sm:$0xff]
    %v74 = vld [vmem:[#allocation7 + $0x8] sm:$0xff]
    %v75 = vld [vmem:[#allocation7 + $0x10] sm:$0xff]
    %v76 = vld [vmem:[#allocation7 + $0x18] sm:$0xff]
    %v77 = vld [vmem:[#allocation5] sm:$0xff]
    %v78 = vld [vmem:[#allocation8] sm:$0xff]
    %v79 = vld [vmem:[#allocation8 + $0x8] sm:$0xff]
    %vm80 = vcmask 130048
    %v82 = vsel %vm80, %v77, 0
    %84 = vmatprep.subr.mxu0 0.0
    %85 = vmatpush1.msra.mxu0 0.0
    %86 = vmatprep.subr.mxu0 0.0
    %87 = vmatpush1.msra.mxu0 0.0
    %88 = vmatprep.subr.mxu0 0.0
    %89 = vmatpush1.msra.mxu0 0.0
    %90 = vmatprep.subr.mxu0 0.0
    %91 = vmatpush1.msra.mxu0 0.0
    %92 = vmatprep.subr.mxu0 0.0
    %93 = vmatpush1.msra.mxu0 0.0
    %94 = vmatprep.subr.mxu0 0.0
    %95 = vmatpush1.msra.mxu0 0.0
    %96 = vmatprep.subr.mxu0 0.0
    %97 = vmatpush1.msra.mxu0 0.0
    %98 = vmatprep.subr.mxu0 0.0
    %99 = vmatpush1.msra.mxu0 0.0
    %100 = vmatprep.subr.mxu0 0.0
    %101 = vmatpush1.msra.mxu0 0.0
    %102 = vmatprep.subr.mxu0 0.0
    %103 = vmatpush1.msra.mxu0 0.0
    %104 = vmatprep.subr.mxu0 0.0
    %105 = vmatpush1.msra.mxu0 0.0
    %106 = vmatprep.subr.mxu0 0.0
    %107 = vmatpush1.msra.mxu0 0.0
    %108 = vmatprep.subr.mxu0 0.0
    %109 = vmatpush1.msra.mxu0 0.0
    %110 = vmatprep.subr.mxu0 0.0
    %111 = vmatpush1.msra.mxu0 0.0
    %112 = vmatprep.subr.mxu0 0.0
    %113 = vmatpush1.msra.mxu0 %v79
    %114 = vmatprep.subr.mxu0 0.0
    %115 = vmatpush1.msra.mxu0 %v78
    %116 = vmatprep.subr.mxu0 0.0
    %117 = vmatpush2.msra.mxu0 0.0
    %118 = vmatprep.subr.mxu0 0.0
    %119 = vmatpush2.msra.mxu0 0.0
    %120 = vmatprep.subr.mxu0 0.0
    %121 = vmatpush2.msra.mxu0 0.0
    %122 = vmatprep.subr.mxu0 0.0
    %123 = vmatpush2.msra.mxu0 0.0
    %124 = vmatprep.subr.mxu0 0.0
    %125 = vmatpush2.msra.mxu0 0.0
    %126 = vmatprep.subr.mxu0 0.0
    %127 = vmatpush2.msra.mxu0 0.0
    %128 = vmatprep.subr.mxu0 0.0
    %129 = vmatpush2.msra.mxu0 0.0
    %130 = vmatprep.subr.mxu0 0.0
    %131 = vmatpush2.msra.mxu0 0.0
    %132 = vmatprep.subr.mxu0 0.0
    %133 = vmatpush2.msra.mxu0 0.0
    %134 = vmatprep.subr.mxu0 0.0
    %135 = vmatpush2.msra.mxu0 0.0
    %136 = vmatprep.subr.mxu0 0.0
    %137 = vmatpush2.msra.mxu0 0.0
    %138 = vmatprep.subr.mxu0 0.0
    %139 = vmatpush2.msra.mxu0 0.0
    %140 = vmatprep.subr.mxu0 0.0
    %141 = vmatpush2.msra.mxu0 0.0
    %142 = vmatprep.subr.mxu0 0.0
    %143 = vmatpush2.msra.mxu0 0.0
    %144 = vmatprep.subr.mxu0 0.0
    %145 = vmatpush2.msra.mxu0 0.0
    %146 = vmatprep.subr.mxu0 0.0
    %147 = vmatpush2.msra.mxu0 0.0
    %148 = vmatprep.mubr.f32.mxu0 0.0
    %149 = vmatmul.mubr.f32.gmra.mxu0 %v82
    %v150 = vpop.f32.mrf.mxu0
    %v151 = vadd.f32 0.0, %v150
    %v152 = vpop.f32.mrf.mxu0
    %153 = vdwg.mxu0
    %vm154 = vcmask 261120
    %v156 = vsel %vm154, %v72, 0
    %158 = vmatprep.subr.mxu0 0.0
    %159 = vmatpush1.msra.mxu0 0.0
    %160 = vmatprep.subr.mxu0 0.0
    %161 = vmatpush1.msra.mxu0 0.0
    %162 = vmatprep.subr.mxu0 0.0
    %163 = vmatpush1.msra.mxu0 0.0
    %164 = vmatprep.subr.mxu0 0.0
    %165 = vmatpush1.msra.mxu0 0.0
    %166 = vmatprep.subr.mxu0 0.0
    %167 = vmatpush1.msra.mxu0 0.0
    %168 = vmatprep.subr.mxu0 0.0
    %169 = vmatpush1.msra.mxu0 0.0
    %170 = vmatprep.subr.mxu0 0.0
    %171 = vmatpush1.msra.mxu0 0.0
    %172 = vmatprep.subr.mxu0 0.0
    %173 = vmatpush1.msra.mxu0 0.0
    %174 = vmatprep.subr.mxu0 0.0
    %175 = vmatpush1.msra.mxu0 0.0
    %176 = vmatprep.subr.mxu0 0.0
    %177 = vmatpush1.msra.mxu0 0.0
    %178 = vmatprep.subr.mxu0 0.0
    %179 = vmatpush1.msra.mxu0 0.0
    %180 = vmatprep.subr.mxu0 0.0
    %181 = vmatpush1.msra.mxu0 0.0
    %182 = vmatprep.subr.mxu0 0.0
    %183 = vmatpush1.msra.mxu0 %v76
    %184 = vmatprep.subr.mxu0 0.0
    %185 = vmatpush1.msra.mxu0 %v75
    %186 = vmatprep.subr.mxu0 0.0
    %187 = vmatpush1.msra.mxu0 %v74
    %188 = vmatprep.subr.mxu0 0.0
    %189 = vmatpush1.msra.mxu0 %v73
    %190 = vmatprep.subr.mxu0 0.0
    %191 = vmatpush2.msra.mxu0 0.0
    %192 = vmatprep.subr.mxu0 0.0
    %193 = vmatpush2.msra.mxu0 0.0
    %194 = vmatprep.subr.mxu0 0.0
    %195 = vmatpush2.msra.mxu0 0.0
    %196 = vmatprep.subr.mxu0 0.0
    %197 = vmatpush2.msra.mxu0 0.0
    %198 = vmatprep.subr.mxu0 0.0
    %199 = vmatpush2.msra.mxu0 0.0
    %200 = vmatprep.subr.mxu0 0.0
    %201 = vmatpush2.msra.mxu0 0.0
    %202 = vmatprep.subr.mxu0 0.0
    %203 = vmatpush2.msra.mxu0 0.0
    %204 = vmatprep.subr.mxu0 0.0
    %205 = vmatpush2.msra.mxu0 0.0
    %206 = vmatprep.subr.mxu0 0.0
    %207 = vmatpush2.msra.mxu0 0.0
    %208 = vmatprep.subr.mxu0 0.0
    %209 = vmatpush2.msra.mxu0 0.0
    %210 = vmatprep.subr.mxu0 0.0
    %211 = vmatpush2.msra.mxu0 0.0
    %212 = vmatprep.subr.mxu0 0.0
    %213 = vmatpush2.msra.mxu0 0.0
    %214 = vmatprep.subr.mxu0 0.0
    %215 = vmatpush2.msra.mxu0 0.0
    %216 = vmatprep.subr.mxu0 0.0
    %217 = vmatpush2.msra.mxu0 0.0
    %218 = vmatprep.subr.mxu0 0.0
    %219 = vmatpush2.msra.mxu0 0.0
    %220 = vmatprep.subr.mxu0 0.0
    %221 = vmatpush2.msra.mxu0 0.0
    %222 = vmatprep.mubr.f32.mxu0 0.0
    %223 = vmatmul.mubr.f32.gmra.mxu0 %v156
    %v224 = vpop.f32.mrf.mxu0
    %v225 = vadd.f32 %v151, %v224
    %v226 = vpop.f32.mrf.mxu0
    %227 = vdwg.mxu0
    %v228 = vld [vmem:[%s4] sm:$0x1]
    %v230 = vlaneseq
    %v231 = vshrl.u32 %v230, 7
    %v232 = vsub.s32 0, %v231
    %v233 = vrot.slane %v228, %v232
    %v235 = vadd.f32 %v225, %v233
    %236 = vst [vmem:[#allocation10] sm:$0xff] %v235
    // Predicated region
    $region38: #{icn_layer_forward.1} parent=1 // pred_check
      _
    $region39: #{icn_layer_forward.1} parent=1 // pred_check_branch
      %238 = sbr.rel (0) target = $region41
    $region40: #{icn_layer_forward.1} parent=1 // pred_region
      %s240 = ssub.s32 128, 128
      %241 = vsyncadd [#allocation4], %s240
      %s243 = sshll.u32 [#allocation10], 4
      %s244 = int_to_ptr.vmem [resolvable:$true] %s243
      %246 = dma.vmem_to_hbm [thread:$0]  %s244, 128, %s5, [#allocation4]
    $region41: #{icn_layer_forward.1} parent=1 // pred_fallthru
      _
    // Predicated region
    $region42: #{icn_layer_forward.1} parent=1 // pred_check
      _
    $region43: #{icn_layer_forward.1} parent=1 // pred_check_branch
      %248 = sbr.rel (0) target = $region45
    $region44: #{icn_layer_forward.1} parent=1 // pred_region
      %249 = dma.done [#allocation4], 128
    $region45: #{icn_layer_forward.1} parent=1 // pred_fallthru
      _
    %250 = vsyncpa [#allocation3], 1
    %251 = vsyncpa [#allocation6], 1
    %252 = vsyncpa [#allocation9], 1
    %253 = vsyncpa [#allocation4], 1

</llo_original>
